<compile_context>
chip_gen: v6e
topology: v6e:2x2x1
jax: 0.10.0
libtpu: 0.0.40
codegen_flags: <defaults>
</compile_context>

<pallas_src>
import functools
import math

import jax
import jax.numpy as jnp
from jax.experimental import pallas as pl
from jax.experimental.pallas import tpu as pltpu


def _make_fused_mlp_kernel(num_layers):
    """Builds a kernel computing the whole Linear chain for one batch tile."""

    def kernel(*refs):
        # refs = (x_ref, w0, b0, w1, b1, ..., w_{L-1}, b_{L-1}, o_ref)
        x_ref = refs[0]
        o_ref = refs[-1]
        h = x_ref[...]                              # (in_f, TB)  feature-major
        for l in range(num_layers):
            w = refs[1 + 2 * l][...]                # (out_l, in_l)  PyTorch layout
            b = refs[1 + 2 * l + 1][...]            # (out_l, 1)
            # W @ X contracts in_l directly on the MXU -- no transpose needed.
            h = jnp.dot(w, h, preferred_element_type=jnp.float32) + b
        o_ref[...] = h.astype(o_ref.dtype)          # (out_last, TB) lane-dense

    return kernel


def fused_mlp_forward(x, params, *, tb=512):
    """Whole Linear chain in a single pallas_call.

    x:       (batch, in_features) float32
    params:  list of (w, b), w with PyTorch (out, in) layout, b with shape (out,)
    returns: (batch, out_last)
    """
    m, in_f = x.shape
    num_layers = len(params)
    out_f = params[-1][0].shape[0]

    # Feature-major: lane axis = batch (lane-dense stores for large batches).
    xt = x.T                                        # (in_f, m)

    if m <= tb:
        tb_eff = m                                  # single tile == full batch
        m_pad = m
    else:
        assert tb % 128 == 0
        tb_eff = tb
        m_pad = ((m + tb - 1) // tb) * tb
        if m_pad != m:
            xt = jnp.pad(xt, ((0, 0), (0, m_pad - m)))

    grid = (m_pad // tb_eff,)

    in_specs = [pl.BlockSpec((in_f, tb_eff), lambda i: (0, i))]   # batch tile
    flat_args = [xt]
    for w, b in params:
        o, i_ = w.shape
        in_specs.append(pl.BlockSpec((o, i_), lambda i: (0, 0)))  # resident weight
        in_specs.append(pl.BlockSpec((o, 1), lambda i: (0, 0)))   # resident bias
        flat_args.append(w)
        flat_args.append(b.reshape(o, 1))

    out = pl.pallas_call(
        _make_fused_mlp_kernel(num_layers),
        out_shape=jax.ShapeDtypeStruct((out_f, m_pad), x.dtype),
        grid_spec=pltpu.PrefetchScalarGridSpec(
            num_scalar_prefetch=0,
            grid=grid,
            in_specs=in_specs,
            out_specs=pl.BlockSpec((out_f, tb_eff), lambda i: (0, i)),
        ),
        compiler_params=pltpu.CompilerParams(
            dimension_semantics=("parallel",),
        ),
    )(*flat_args)

    # Drop padding, return PyTorch-style (batch, out) layout.
    return out[:, :m].T


class MyModelPallas:
    """Mirrors MyModel: Linear chain input -> hidden[0] -> ... -> hidden[-1] -> 1."""

    def __init__(self, config, key):
        self.config = config
        dims = [config["input_features"]] + list(config["hidden_features"]) + [1]
        self.params = []
        for idx in range(len(dims) - 1):
            fan_in, fan_out = dims[idx], dims[idx + 1]
            key, kw, kb = jax.random.split(key, 3)
            bound = 1.0 / math.sqrt(fan_in)
            # PyTorch nn.Linear layout: weight (out, in), bias (out,)
            w = jax.random.uniform(kw, (fan_out, fan_in), jnp.float32, -bound, bound)
            b = jax.random.uniform(kb, (fan_out,), jnp.float32, -bound, bound)
            self.params.append((w, b))

    @functools.partial(jax.jit, static_argnums=0)
    def __call__(self, x):
        return fused_mlp_forward(x, self.params)

    # TODO(synk): predict()'s pandas transform() + sigmoid are host-side
    # preprocessing / post-processing, intentionally not part of forward().


def _reference(x, params):
    # plain-JAX reference for sanity checking
    for w, b in params:
        x = x @ w.T + b
    return x


if __name__ == "__main__":
    key = jax.random.PRNGKey(0)
    key, k_model, k_x, k_x2 = jax.random.split(key, 4)

    # 7 input features, matching the `transform` feature list:
    # ['Reason_A','Reason_B','Reason_C','Reason_NaN','AGE','SPO2_MAX','SP02_MAX_NaN']
    config = {"input_features": 7, "hidden_features": [32, 32]}
    model = MyModelPallas(config, k_model)

    # Small batch (single tile, no padding path).
    batch = 8
    x = jax.random.normal(k_x, (batch, config["input_features"]), jnp.float32)
    logits = jax.block_until_ready(model(x))
    ref = _reference(x, model.params)
    assert logits.shape == (batch, 1)
    assert jnp.allclose(logits, ref, atol=1e-5, rtol=1e-5)

    # Larger, non-tile-multiple batch: exercises cdiv grid + padding and the
    # lane-dense multi-step (megacore-parallel) path.
    batch2 = 1000
    x2 = jax.random.normal(k_x2, (batch2, config["input_features"]), jnp.float32)
    logits2 = jax.block_until_ready(model(x2))
    ref2 = _reference(x2, model.params)
    assert logits2.shape == (batch2, 1)
    assert jnp.allclose(logits2, ref2, atol=1e-5, rtol=1e-5)

    print("KERNEL_OK")
</pallas_src>

<mosaic_0001>
module attributes {stable_mosaic.version = 11 : i64} {
  func.func @kernel(%arg0: i32, %arg1: memref<7x8xf32, #tpu.memory_space<vmem>>, %arg2: memref<32x7xf32, #tpu.memory_space<vmem>>, %arg3: memref<32x1xf32, #tpu.memory_space<vmem>>, %arg4: memref<32x32xf32, #tpu.memory_space<vmem>>, %arg5: memref<32x1xf32, #tpu.memory_space<vmem>>, %arg6: memref<1x32xf32, #tpu.memory_space<vmem>>, %arg7: memref<1x1xf32, #tpu.memory_space<vmem>>, %arg8: memref<1x8xf32, #tpu.memory_space<vmem>>) attributes {dimension_semantics = [#tpu.dimension_semantics<parallel>], iteration_bounds = array<i64: 1>, scalar_prefetch = 0 : i64, scratch_operands = 0 : i64, tpu.core_type = #tpu.core_type<tc>, window_params = [{transform_indices = @transform_0, window_bounds = array<i64: 7, 8>}, {pipeline_mode = #tpu.pipeline_mode<synchronous>, transform_indices = @transform_1, window_bounds = array<i64: 32, 7>}, {pipeline_mode = #tpu.pipeline_mode<synchronous>, transform_indices = @transform_2, window_bounds = array<i64: 32, 1>}, {pipeline_mode = #tpu.pipeline_mode<synchronous>, transform_indices = @transform_3, window_bounds = array<i64: 32, 32>}, {pipeline_mode = #tpu.pipeline_mode<synchronous>, transform_indices = @transform_4, window_bounds = array<i64: 32, 1>}, {pipeline_mode = #tpu.pipeline_mode<synchronous>, transform_indices = @transform_5, window_bounds = array<i64: 1, 32>}, {pipeline_mode = #tpu.pipeline_mode<synchronous>, transform_indices = @transform_6, window_bounds = array<i64: 1, 1>}, {transform_indices = @transform_7, window_bounds = array<i64: 1, 8>}]} {
    %c0 = arith.constant 0 : index
    %c0_0 = arith.constant 0 : index
    %0 = vector.load %arg1[%c0, %c0_0] : memref<7x8xf32, #tpu.memory_space<vmem>>, vector<7x8xf32>
    %c0_1 = arith.constant 0 : index
    %c0_2 = arith.constant 0 : index
    %1 = vector.load %arg2[%c0_1, %c0_2] : memref<32x7xf32, #tpu.memory_space<vmem>>, vector<32x7xf32>
    %c0_3 = arith.constant 0 : index
    %c0_4 = arith.constant 0 : index
    %2 = vector.load %arg3[%c0_3, %c0_4] : memref<32x1xf32, #tpu.memory_space<vmem>>, vector<32x1xf32>
    %cst = arith.constant dense<0.000000e+00> : vector<32x8xf32>
    %3 = tpu.matmul %1, %0, %cst {dimension_numbers = #tpu.dot_dimension_numbers<[1], [0], [0], [1], [0, 0, 1, 1], [], []>} : vector<32x7xf32>, vector<7x8xf32>, vector<32x8xf32> -> vector<32x8xf32>
    %4 = vector.broadcast %2 : vector<32x1xf32> to vector<32x8xf32>
    %5 = arith.addf %3, %4 : vector<32x8xf32>
    %c0_5 = arith.constant 0 : index
    %c0_6 = arith.constant 0 : index
    %6 = vector.load %arg4[%c0_5, %c0_6] : memref<32x32xf32, #tpu.memory_space<vmem>>, vector<32x32xf32>
    %c0_7 = arith.constant 0 : index
    %c0_8 = arith.constant 0 : index
    %7 = vector.load %arg5[%c0_7, %c0_8] : memref<32x1xf32, #tpu.memory_space<vmem>>, vector<32x1xf32>
    %cst_9 = arith.constant dense<0.000000e+00> : vector<32x8xf32>
    %8 = tpu.matmul %6, %5, %cst_9 {dimension_numbers = #tpu.dot_dimension_numbers<[1], [0], [0], [1], [0, 0, 1, 1], [], []>} : vector<32x32xf32>, vector<32x8xf32>, vector<32x8xf32> -> vector<32x8xf32>
    %9 = vector.broadcast %7 : vector<32x1xf32> to vector<32x8xf32>
    %10 = arith.addf %8, %9 : vector<32x8xf32>
    %c0_10 = arith.constant 0 : index
    %c0_11 = arith.constant 0 : index
    %11 = vector.load %arg6[%c0_10, %c0_11] : memref<1x32xf32, #tpu.memory_space<vmem>>, vector<1x32xf32>
    %c0_12 = arith.constant 0 : index
    %c0_13 = arith.constant 0 : index
    %12 = vector.load %arg7[%c0_12, %c0_13] : memref<1x1xf32, #tpu.memory_space<vmem>>, vector<1x1xf32>
    %cst_14 = arith.constant dense<0.000000e+00> : vector<1x8xf32>
    %13 = tpu.matmul %11, %10, %cst_14 {dimension_numbers = #tpu.dot_dimension_numbers<[1], [0], [0], [1], [0, 0, 1, 1], [], []>} : vector<1x32xf32>, vector<32x8xf32>, vector<1x8xf32> -> vector<1x8xf32>
    %14 = vector.broadcast %12 : vector<1x1xf32> to vector<1x8xf32>
    %15 = arith.addf %13, %14 : vector<1x8xf32>
    %c0_15 = arith.constant 0 : index
    %c0_16 = arith.constant 0 : index
    %16 = vector.load %arg8[%c0_15, %c0_16] : memref<1x8xf32, #tpu.memory_space<vmem>>, vector<1x8xf32>
    tpu.vector_store %arg8[%c0_15, %c0_16], %15 {strides = array<i32>} : memref<1x8xf32, #tpu.memory_space<vmem>>, vector<1x8xf32>,
    return
  }
  func.func @transform_0(%arg0: i32) -> (i32, i32) {
    %c0_i32 = arith.constant 0 : i32
    %c0_i32_0 = arith.constant 0 : i32
    return %c0_i32, %arg0 : i32, i32
  }
  func.func @transform_1(%arg0: i32) -> (i32, i32) {
    %c0_i32 = arith.constant 0 : i32
    %c0_i32_0 = arith.constant 0 : i32
    %c0_i32_1 = arith.constant 0 : i32
    return %c0_i32, %c0_i32_0 : i32, i32
  }
  func.func @transform_2(%arg0: i32) -> (i32, i32) {
    %c0_i32 = arith.constant 0 : i32
    %c0_i32_0 = arith.constant 0 : i32
    %c0_i32_1 = arith.constant 0 : i32
    return %c0_i32, %c0_i32_0 : i32, i32
  }
  func.func @transform_3(%arg0: i32) -> (i32, i32) {
    %c0_i32 = arith.constant 0 : i32
    %c0_i32_0 = arith.constant 0 : i32
    %c0_i32_1 = arith.constant 0 : i32
    return %c0_i32, %c0_i32_0 : i32, i32
  }
  func.func @transform_4(%arg0: i32) -> (i32, i32) {
    %c0_i32 = arith.constant 0 : i32
    %c0_i32_0 = arith.constant 0 : i32
    %c0_i32_1 = arith.constant 0 : i32
    return %c0_i32, %c0_i32_0 : i32, i32
  }
  func.func @transform_5(%arg0: i32) -> (i32, i32) {
    %c0_i32 = arith.constant 0 : i32
    %c0_i32_0 = arith.constant 0 : i32
    %c0_i32_1 = arith.constant 0 : i32
    return %c0_i32, %c0_i32_0 : i32, i32
  }
  func.func @transform_6(%arg0: i32) -> (i32, i32) {
    %c0_i32 = arith.constant 0 : i32
    %c0_i32_0 = arith.constant 0 : i32
    %c0_i32_1 = arith.constant 0 : i32
    return %c0_i32, %c0_i32_0 : i32, i32
  }
  func.func @transform_7(%arg0: i32) -> (i32, i32) {
    %c0_i32 = arith.constant 0 : i32
    %c0_i32_0 = arith.constant 0 : i32
    return %c0_i32, %arg0 : i32, i32
  }
}

</mosaic_0001>

<llo_original>
// kernel: a_call__.1
$region0: #{a_call__.1}
  #allocation0 [shape = 'u32[]', space=smem, size = 0x4, offset = 0x4, fixed_abs, tag = 'smem constant byte address 0x4 - core index']
  #allocation1 [shape = 'u32[144,128]{1,0:T(1,128)}', space=vmem, size = 0x12000, scoped, tag = 'internal scratch']
  #allocation2 [shape = 'f32[1,1]{1,0:T(1,128)S(1)}', space=vmem, size = 0x200, scoped, tag = 'scoped memory for a_call__.1']
  %s0 = inlined_call_operand.vmem [shape: f32[7,8], index: 0, kind: input, shape index: {}]
  %s1 = inlined_call_operand.hbm [shape: f32[32,7], index: 1, kind: input, shape index: {}]
  %s2 = inlined_call_operand.hbm [shape: f32[32,1], index: 2, kind: input, shape index: {}]
  %s3 = inlined_call_operand.hbm [shape: f32[32,32], index: 3, kind: input, shape index: {}]
  %s4 = inlined_call_operand.hbm [shape: f32[32,1], index: 4, kind: input, shape index: {}]
  %s5 = inlined_call_operand.vmem [shape: f32[1,32], index: 5, kind: input, shape index: {}]
  %s6 = inlined_call_operand.<no memory space> [shape: f32[1,1], index: 6, kind: input, shape index: {}]
  %s7 = inlined_call_operand.hbm [shape: f32[1,8], index: 7, kind: output, shape index: {}]
  %s8 = sld [smem:[#allocation0]]
  $region54: #{a_call__.1} parent=0
    _
  %s10 = ssub.s32 1, %s8
  %s11 = scalar_select 0, %s10, %s8
  %v12 = vstv %s6
  %13 = vst [vmem:[#allocation2] sm:$0x1] %v12
  $region1: #{a_call__.1} parent=0
    #allocation3 [shape = 'u8[16384]{0}', space=vmem, size = 0x4000, scoped, tag = 'input window, operand 1, single buffered']
    #allocation4 [shape = 's32[1]{0}', space=sflag, size = 0x4, scoped, tag = 'scoped memory for a_call__.1']
    #allocation5 [shape = 's32[1]{0}', space=sflag, size = 0x4, scoped, tag = 'scoped memory for a_call__.1']
    #allocation6 [shape = 'u8[16384]{0}', space=vmem, size = 0x4000, scoped, tag = 'input window, operand 2, single buffered']
    #allocation7 [shape = 's32[1]{0}', space=sflag, size = 0x4, scoped, tag = 'scoped memory for a_call__.1']
    #allocation8 [shape = 'u8[16384]{0}', space=vmem, size = 0x4000, scoped, tag = 'input window, operand 3, single buffered']
    #allocation9 [shape = 'u8[16384]{0}', space=vmem, size = 0x4000, scoped, tag = 'input window, operand 4, single buffered']
    #allocation10 [shape = 's32[1]{0}', space=sflag, size = 0x4, scoped, tag = 'scoped memory for a_call__.1']
    #allocation11 [shape = 'u8[512]{0}', space=vmem, size = 0x400, scoped, tag = 'output window, operand 0, single buffered']
    %14 = vsyncpa [#allocation4], 0
    %15 = vsyncpa [#allocation7], 0
    %16 = vsyncpa [#allocation10], 0
    %17 = vsyncpa [#allocation5], 0
    // Predicated region
    $region2: #{a_call__.1} parent=1 // pred_check
      _
    $region3: #{a_call__.1} parent=1 // pred_check_branch
      %19 = sbr.rel (0) target = $region5
    $region4: #{a_call__.1} parent=1 // pred_region
      _
    $region5: #{a_call__.1} parent=1 // pred_fallthru
      _
    // Predicated region
    $region6: #{a_call__.1} parent=1 // pred_check
      _
    $region7: #{a_call__.1} parent=1 // pred_check_branch
      %21 = sbr.rel (0) target = $region9
    $region8: #{a_call__.1} parent=1 // pred_region
      %s23 = ssub.s32 512, 512
      %24 = vsyncadd [#allocation4], %s23
      %s25 = sshll.u32 [#allocation3], 4
      %s26 = int_to_ptr.vmem [resolvable:$true] %s25
      %31 = dma.hbm_to_vmem [thread:$0]  %s1, 512, %s26, [#allocation4], 128, 128, 8
    $region9: #{a_call__.1} parent=1 // pred_fallthru
      _
    // Predicated region
    $region10: #{a_call__.1} parent=1 // pred_check
      _
    $region11: #{a_call__.1} parent=1 // pred_check_branch
      %33 = sbr.rel (0) target = $region13
    $region12: #{a_call__.1} parent=1 // pred_region
      %s35 = ssub.s32 512, 512
      %36 = vsyncadd [#allocation7], %s35
      %s37 = sshll.u32 [#allocation6], 4
      %s38 = int_to_ptr.vmem [resolvable:$true] %s37
      %43 = dma.hbm_to_vmem [thread:$0]  %s2, 512, %s38, [#allocation7], 128, 128, 8
    $region13: #{a_call__.1} parent=1 // pred_fallthru
      _
    // Predicated region
    $region14: #{a_call__.1} parent=1 // pred_check
      _
    $region15: #{a_call__.1} parent=1 // pred_check_branch
      %45 = sbr.rel (0) target = $region17
    $region16: #{a_call__.1} parent=1 // pred_region
      %s47 = ssub.s32 512, 512
      %48 = vsyncadd [#allocation7], %s47
      %s49 = sshll.u32 [#allocation8], 4
      %s50 = int_to_ptr.vmem [resolvable:$true] %s49
      %55 = dma.hbm_to_vmem [thread:$0]  %s3, 512, %s50, [#allocation7], 128, 128, 8
    $region17: #{a_call__.1} parent=1 // pred_fallthru
      _
    // Predicated region
    $region18: #{a_call__.1} parent=1 // pred_check
      _
    $region19: #{a_call__.1} parent=1 // pred_check_branch
      %57 = sbr.rel (0) target = $region21
    $region20: #{a_call__.1} parent=1 // pred_region
      %s59 = ssub.s32 512, 512
      %60 = vsyncadd [#allocation10], %s59
      %s61 = sshll.u32 [#allocation9], 4
      %s62 = int_to_ptr.vmem [resolvable:$true] %s61
      %67 = dma.hbm_to_vmem [thread:$0]  %s4, 512, %s62, [#allocation10], 128, 128, 8
    $region21: #{a_call__.1} parent=1 // pred_fallthru
      _
    // Predicated region
    $region22: #{a_call__.1} parent=1 // pred_check
      _
    $region23: #{a_call__.1} parent=1 // pred_check_branch
      %69 = sbr.rel (0) target = $region25
    $region24: #{a_call__.1} parent=1 // pred_region
      _
    $region25: #{a_call__.1} parent=1 // pred_fallthru
      _
    // Predicated region
    $region26: #{a_call__.1} parent=1 // pred_check
      _
    $region27: #{a_call__.1} parent=1 // pred_check_branch
      %71 = sbr.rel (0) target = $region29
    $region28: #{a_call__.1} parent=1 // pred_region
      _
    $region29: #{a_call__.1} parent=1 // pred_fallthru
      _
    // Predicated region
    $region30: #{a_call__.1} parent=1 // pred_check
      _
    $region31: #{a_call__.1} parent=1 // pred_check_branch
      %73 = sbr.rel (0) target = $region33
    $region32: #{a_call__.1} parent=1 // pred_region
      %74 = dma.done [#allocation4], 512
    $region33: #{a_call__.1} parent=1 // pred_fallthru
      _
    // Predicated region
    $region34: #{a_call__.1} parent=1 // pred_check
      _
    $region35: #{a_call__.1} parent=1 // pred_check_branch
      %76 = sbr.rel (0) target = $region37
    $region36: #{a_call__.1} parent=1 // pred_region
      %77 = dma.done [#allocation7], 512
    $region37: #{a_call__.1} parent=1 // pred_fallthru
      _
    // Predicated region
    $region38: #{a_call__.1} parent=1 // pred_check
      _
    $region39: #{a_call__.1} parent=1 // pred_check_branch
      %79 = sbr.rel (0) target = $region41
    $region40: #{a_call__.1} parent=1 // pred_region
      %80 = dma.done [#allocation7], 512
    $region41: #{a_call__.1} parent=1 // pred_fallthru
      _
    // Predicated region
    $region42: #{a_call__.1} parent=1 // pred_check
      _
    $region43: #{a_call__.1} parent=1 // pred_check_branch
      %82 = sbr.rel (0) target = $region45
    $region44: #{a_call__.1} parent=1 // pred_region
      %83 = dma.done [#allocation10], 512
    $region45: #{a_call__.1} parent=1 // pred_fallthru
      _
    %v84 = vld [vmem:[%s0] sm:$0x7f]
    %v85 = vld [vmem:[#allocation3] sm:$0xff]
    %v86 = vld [vmem:[#allocation3 + $0x8] sm:$0xff]
    %v87 = vld [vmem:[#allocation3 + $0x10] sm:$0xff]
    %v88 = vld [vmem:[#allocation3 + $0x18] sm:$0xff]
    %v89 = vld [vmem:[#allocation6] sm:$0xff]
    %v90 = vld [vmem:[#allocation6 + $0x8] sm:$0xff]
    %v91 = vld [vmem:[#allocation6 + $0x10] sm:$0xff]
    %v92 = vld [vmem:[#allocation6 + $0x18] sm:$0xff]
    %94 = vset.pattern.permute.xlu0 0
    %95 = vperm.xlu0 %94, %v89
    %v96 = vpop.permute.xlu0 %95
    %99 = vset.pattern.permute.xlu0 0
    %100 = vperm.xlu0 %99, %v90
    %v101 = vpop.permute.xlu0 %100
    %104 = vset.pattern.permute.xlu0 0
    %105 = vperm.xlu0 %104, %v91
    %v106 = vpop.permute.xlu0 %105
    %109 = vset.pattern.permute.xlu0 0
    %110 = vperm.xlu0 %109, %v92
    %v111 = vpop.permute.xlu0 %110
    %vm113 = vcmask 56320
    %v115 = vsel %vm113, %v85, 0
    %v118 = vsel %vm113, %v86, 0
    %v121 = vsel %vm113, %v87, 0
    %v124 = vsel %vm113, %v88, 0
    %vm126 = vcmask 1046528
    %v128 = vsel %vm126, %v84, 0
    %130 = vmatprep.subr.mxu0 0.0
    %131 = vmatpush1.msra.mxu0 0.0
    %132 = vmatprep.subr.mxu0 0.0
    %133 = vmatpush1.msra.mxu0 0.0
    %134 = vmatprep.subr.mxu0 0.0
    %135 = vmatpush1.msra.mxu0 0.0
    %136 = vmatprep.subr.mxu0 0.0
    %137 = vmatpush1.msra.mxu0 0.0
    %138 = vmatprep.subr.mxu0 0.0
    %139 = vmatpush1.msra.mxu0 0.0
    %140 = vmatprep.subr.mxu0 0.0
    %141 = vmatpush1.msra.mxu0 0.0
    %142 = vmatprep.subr.mxu0 0.0
    %143 = vmatpush1.msra.mxu0 0.0
    %144 = vmatprep.subr.mxu0 0.0
    %145 = vmatpush1.msra.mxu0 0.0
    %146 = vmatprep.subr.mxu0 0.0
    %147 = vmatpush1.msra.mxu0 0.0
    %148 = vmatprep.subr.mxu0 0.0
    %149 = vmatpush1.msra.mxu0 0.0
    %150 = vmatprep.subr.mxu0 0.0
    %151 = vmatpush1.msra.mxu0 0.0
    %152 = vmatprep.subr.mxu0 0.0
    %153 = vmatpush1.msra.mxu0 0.0
    %154 = vmatprep.subr.mxu0 0.0
    %155 = vmatpush1.msra.mxu0 0.0
    %156 = vmatprep.subr.mxu0 0.0
    %157 = vmatpush1.msra.mxu0 0.0
    %158 = vmatprep.subr.mxu0 0.0
    %159 = vmatpush1.msra.mxu0 0.0
    %160 = vmatprep.subr.mxu0 0.0
    %161 = vmatpush1.msra.mxu0 %v128
    %162 = vmatprep.subr.mxu0 0.0
    %163 = vmatpush2.msra.mxu0 0.0
    %164 = vmatprep.subr.mxu0 0.0
    %165 = vmatpush2.msra.mxu0 0.0
    %166 = vmatprep.subr.mxu0 0.0
    %167 = vmatpush2.msra.mxu0 0.0
    %168 = vmatprep.subr.mxu0 0.0
    %169 = vmatpush2.msra.mxu0 0.0
    %170 = vmatprep.subr.mxu0 0.0
    %171 = vmatpush2.msra.mxu0 0.0
    %172 = vmatprep.subr.mxu0 0.0
    %173 = vmatpush2.msra.mxu0 0.0
    %174 = vmatprep.subr.mxu0 0.0
    %175 = vmatpush2.msra.mxu0 0.0
    %176 = vmatprep.subr.mxu0 0.0
    %177 = vmatpush2.msra.mxu0 0.0
    %178 = vmatprep.subr.mxu0 0.0
    %179 = vmatpush2.msra.mxu0 0.0
    %180 = vmatprep.subr.mxu0 0.0
    %181 = vmatpush2.msra.mxu0 0.0
    %182 = vmatprep.subr.mxu0 0.0
    %183 = vmatpush2.msra.mxu0 0.0
    %184 = vmatprep.subr.mxu0 0.0
    %185 = vmatpush2.msra.mxu0 0.0
    %186 = vmatprep.subr.mxu0 0.0
    %187 = vmatpush2.msra.mxu0 0.0
    %188 = vmatprep.subr.mxu0 0.0
    %189 = vmatpush2.msra.mxu0 0.0
    %190 = vmatprep.subr.mxu0 0.0
    %191 = vmatpush2.msra.mxu0 0.0
    %192 = vmatprep.subr.mxu0 0.0
    %193 = vmatpush2.msra.mxu0 0.0
    %194 = vmatprep.mubr.f32.mxu0 0.0
    %195 = vmatmul.mubr.f32.gmra.mxu0 %v115
    %v196 = vpop.f32.mrf.mxu0
    %v197 = vadd.f32 %v96, %v196
    %v198 = vpop.f32.mrf.mxu0
    %199 = vmatprep.mubr.f32.mxu0 0.0
    %200 = vmatmul.mubr.f32.gmra.mxu0 %v118
    %v201 = vpop.f32.mrf.mxu0
    %v202 = vadd.f32 %v101, %v201
    %v203 = vpop.f32.mrf.mxu0
    %204 = vmatprep.mubr.f32.mxu0 0.0
    %205 = vmatmul.mubr.f32.gmra.mxu0 %v121
    %v206 = vpop.f32.mrf.mxu0
    %v207 = vadd.f32 %v106, %v206
    %v208 = vpop.f32.mrf.mxu0
    %209 = vmatprep.mubr.f32.mxu0 0.0
    %210 = vmatmul.mubr.f32.gmra.mxu0 %v124
    %v211 = vpop.f32.mrf.mxu0
    %v212 = vadd.f32 %v111, %v211
    %v213 = vpop.f32.mrf.mxu0
    %214 = vdwg.mxu0
    %v215 = vld [vmem:[#allocation8] sm:$0xff]
    %v216 = vld [vmem:[#allocation8 + $0x8] sm:$0xff]
    %v217 = vld [vmem:[#allocation8 + $0x10] sm:$0xff]
    %v218 = vld [vmem:[#allocation8 + $0x18] sm:$0xff]
    %v219 = vld [vmem:[#allocation9] sm:$0xff]
    %v220 = vld [vmem:[#allocation9 + $0x8] sm:$0xff]
    %v221 = vld [vmem:[#allocation9 + $0x10] sm:$0xff]
    %v222 = vld [vmem:[#allocation9 + $0x18] sm:$0xff]
    %224 = vset.pattern.permute.xlu0 0
    %225 = vperm.xlu0 %224, %v219
    %v226 = vpop.permute.xlu0 %225
    %229 = vset.pattern.permute.xlu0 0
    %230 = vperm.xlu0 %229, %v220
    %v231 = vpop.permute.xlu0 %230
    %234 = vset.pattern.permute.xlu0 0
    %235 = vperm.xlu0 %234, %v221
    %v236 = vpop.permute.xlu0 %235
    %239 = vset.pattern.permute.xlu0 0
    %240 = vperm.xlu0 %239, %v222
    %v241 = vpop.permute.xlu0 %240
    %vm243 = vcmask 261120
    %v245 = vsel %vm243, %v215, 0
    %v248 = vsel %vm243, %v216, 0
    %v251 = vsel %vm243, %v217, 0
    %v254 = vsel %vm243, %v218, 0
    %256 = vmatprep.subr.mxu0 0.0
    %257 = vmatpush1.msra.mxu0 0.0
    %258 = vmatprep.subr.mxu0 0.0
    %259 = vmatpush1.msra.mxu0 0.0
    %260 = vmatprep.subr.mxu0 0.0
    %261 = vmatpush1.msra.mxu0 0.0
    %262 = vmatprep.subr.mxu0 0.0
    %263 = vmatpush1.msra.mxu0 0.0
    %264 = vmatprep.subr.mxu0 0.0
    %265 = vmatpush1.msra.mxu0 0.0
    %266 = vmatprep.subr.mxu0 0.0
    %267 = vmatpush1.msra.mxu0 0.0
    %268 = vmatprep.subr.mxu0 0.0
    %269 = vmatpush1.msra.mxu0 0.0
    %270 = vmatprep.subr.mxu0 0.0
    %271 = vmatpush1.msra.mxu0 0.0
    %272 = vmatprep.subr.mxu0 0.0
    %273 = vmatpush1.msra.mxu0 0.0
    %274 = vmatprep.subr.mxu0 0.0
    %275 = vmatpush1.msra.mxu0 0.0
    %276 = vmatprep.subr.mxu0 0.0
    %277 = vmatpush1.msra.mxu0 0.0
    %278 = vmatprep.subr.mxu0 0.0
    %279 = vmatpush1.msra.mxu0 0.0
    %280 = vmatprep.subr.mxu0 0.0
    %281 = vmatpush1.msra.mxu0 %v212
    %282 = vmatprep.subr.mxu0 0.0
    %283 = vmatpush1.msra.mxu0 %v207
    %284 = vmatprep.subr.mxu0 0.0
    %285 = vmatpush1.msra.mxu0 %v202
    %286 = vmatprep.subr.mxu0 0.0
    %287 = vmatpush1.msra.mxu0 %v197
    %288 = vmatprep.subr.mxu0 0.0
    %289 = vmatpush2.msra.mxu0 0.0
    %290 = vmatprep.subr.mxu0 0.0
    %291 = vmatpush2.msra.mxu0 0.0
    %292 = vmatprep.subr.mxu0 0.0
    %293 = vmatpush2.msra.mxu0 0.0
    %294 = vmatprep.subr.mxu0 0.0
    %295 = vmatpush2.msra.mxu0 0.0
    %296 = vmatprep.subr.mxu0 0.0
    %297 = vmatpush2.msra.mxu0 0.0
    %298 = vmatprep.subr.mxu0 0.0
    %299 = vmatpush2.msra.mxu0 0.0
    %300 = vmatprep.subr.mxu0 0.0
    %301 = vmatpush2.msra.mxu0 0.0
    %302 = vmatprep.subr.mxu0 0.0
    %303 = vmatpush2.msra.mxu0 0.0
    %304 = vmatprep.subr.mxu0 0.0
    %305 = vmatpush2.msra.mxu0 0.0
    %306 = vmatprep.subr.mxu0 0.0
    %307 = vmatpush2.msra.mxu0 0.0
    %308 = vmatprep.subr.mxu0 0.0
    %309 = vmatpush2.msra.mxu0 0.0
    %310 = vmatprep.subr.mxu0 0.0
    %311 = vmatpush2.msra.mxu0 0.0
    %312 = vmatprep.subr.mxu0 0.0
    %313 = vmatpush2.msra.mxu0 0.0
    %314 = vmatprep.subr.mxu0 0.0
    %315 = vmatpush2.msra.mxu0 0.0
    %316 = vmatprep.subr.mxu0 0.0
    %317 = vmatpush2.msra.mxu0 0.0
    %318 = vmatprep.subr.mxu0 0.0
    %319 = vmatpush2.msra.mxu0 0.0
    %320 = vmatprep.mubr.f32.mxu0 0.0
    %321 = vmatmul.mubr.f32.gmra.mxu0 %v245
    %v322 = vpop.f32.mrf.mxu0
    %v323 = vadd.f32 %v226, %v322
    %v324 = vpop.f32.mrf.mxu0
    %325 = vmatprep.mubr.f32.mxu0 0.0
    %326 = vmatmul.mubr.f32.gmra.mxu0 %v248
    %v327 = vpop.f32.mrf.mxu0
    %v328 = vadd.f32 %v231, %v327
    %v329 = vpop.f32.mrf.mxu0
    %330 = vmatprep.mubr.f32.mxu0 0.0
    %331 = vmatmul.mubr.f32.gmra.mxu0 %v251
    %v332 = vpop.f32.mrf.mxu0
    %v333 = vadd.f32 %v236, %v332
    %v334 = vpop.f32.mrf.mxu0
    %335 = vmatprep.mubr.f32.mxu0 0.0
    %336 = vmatmul.mubr.f32.gmra.mxu0 %v254
    %v337 = vpop.f32.mrf.mxu0
    %v338 = vadd.f32 %v241, %v337
    %v339 = vpop.f32.mrf.mxu0
    %340 = vdwg.mxu0
    %v341 = vld [vmem:[%s5] sm:$0x1]
    %v342 = vld [vmem:[#allocation2] sm:$0x1]
    %344 = vset.pattern.permute.xlu0 0
    %345 = vperm.xlu0 %344, %v342
    %v346 = vpop.permute.xlu0 %345
    %v348 = vlaneseq
    %v349 = vshrl.u32 %v348, 7
    %v350 = vsub.s32 0, %v349
    %v351 = vrot.slane %v346, %v350
    %v353 = vsel %vm243, %v341, 0
    %355 = vmatprep.subr.mxu0 0.0
    %356 = vmatpush1.msra.mxu0 0.0
    %357 = vmatprep.subr.mxu0 0.0
    %358 = vmatpush1.msra.mxu0 0.0
    %359 = vmatprep.subr.mxu0 0.0
    %360 = vmatpush1.msra.mxu0 0.0
    %361 = vmatprep.subr.mxu0 0.0
    %362 = vmatpush1.msra.mxu0 0.0
    %363 = vmatprep.subr.mxu0 0.0
    %364 = vmatpush1.msra.mxu0 0.0
    %365 = vmatprep.subr.mxu0 0.0
    %366 = vmatpush1.msra.mxu0 0.0
    %367 = vmatprep.subr.mxu0 0.0
    %368 = vmatpush1.msra.mxu0 0.0
    %369 = vmatprep.subr.mxu0 0.0
    %370 = vmatpush1.msra.mxu0 0.0
    %371 = vmatprep.subr.mxu0 0.0
    %372 = vmatpush1.msra.mxu0 0.0
    %373 = vmatprep.subr.mxu0 0.0
    %374 = vmatpush1.msra.mxu0 0.0
    %375 = vmatprep.subr.mxu0 0.0
    %376 = vmatpush1.msra.mxu0 0.0
    %377 = vmatprep.subr.mxu0 0.0
    %378 = vmatpush1.msra.mxu0 0.0
    %379 = vmatprep.subr.mxu0 0.0
    %380 = vmatpush1.msra.mxu0 %v338
    %381 = vmatprep.subr.mxu0 0.0
    %382 = vmatpush1.msra.mxu0 %v333
    %383 = vmatprep.subr.mxu0 0.0
    %384 = vmatpush1.msra.mxu0 %v328
    %385 = vmatprep.subr.mxu0 0.0
    %386 = vmatpush1.msra.mxu0 %v323
    %387 = vmatprep.subr.mxu0 0.0
    %388 = vmatpush2.msra.mxu0 0.0
    %389 = vmatprep.subr.mxu0 0.0
    %390 = vmatpush2.msra.mxu0 0.0
    %391 = vmatprep.subr.mxu0 0.0
    %392 = vmatpush2.msra.mxu0 0.0
    %393 = vmatprep.subr.mxu0 0.0
    %394 = vmatpush2.msra.mxu0 0.0
    %395 = vmatprep.subr.mxu0 0.0
    %396 = vmatpush2.msra.mxu0 0.0
    %397 = vmatprep.subr.mxu0 0.0
    %398 = vmatpush2.msra.mxu0 0.0
    %399 = vmatprep.subr.mxu0 0.0
    %400 = vmatpush2.msra.mxu0 0.0
    %401 = vmatprep.subr.mxu0 0.0
    %402 = vmatpush2.msra.mxu0 0.0
    %403 = vmatprep.subr.mxu0 0.0
    %404 = vmatpush2.msra.mxu0 0.0
    %405 = vmatprep.subr.mxu0 0.0
    %406 = vmatpush2.msra.mxu0 0.0
    %407 = vmatprep.subr.mxu0 0.0
    %408 = vmatpush2.msra.mxu0 0.0
    %409 = vmatprep.subr.mxu0 0.0
    %410 = vmatpush2.msra.mxu0 0.0
    %411 = vmatprep.subr.mxu0 0.0
    %412 = vmatpush2.msra.mxu0 0.0
    %413 = vmatprep.subr.mxu0 0.0
    %414 = vmatpush2.msra.mxu0 0.0
    %415 = vmatprep.subr.mxu0 0.0
    %416 = vmatpush2.msra.mxu0 0.0
    %417 = vmatprep.subr.mxu0 0.0
    %418 = vmatpush2.msra.mxu0 0.0
    %419 = vmatprep.mubr.f32.mxu0 0.0
    %420 = vmatmul.mubr.f32.gmra.mxu0 %v353
    %v421 = vpop.f32.mrf.mxu0
    %v422 = vadd.f32 %v351, %v421
    %v423 = vpop.f32.mrf.mxu0
    %424 = vdwg.mxu0
    %vm425 = vcmask 57344
    %426 = vst.msk [vmem:[#allocation11] sm:$0x1] %vm425, %v422
    // Predicated region
    $region46: #{a_call__.1} parent=1 // pred_check
      _
    $region47: #{a_call__.1} parent=1 // pred_check_branch
      %428 = sbr.rel (0) target = $region49
    $region48: #{a_call__.1} parent=1 // pred_region
      %s430 = ssub.s32 16, 16
      %431 = vsyncadd [#allocation5], %s430
      %s433 = sshll.u32 [#allocation11], 4
      %s434 = int_to_ptr.vmem [resolvable:$true] %s433
      %436 = dma.vmem_to_hbm [thread:$0]  %s434, 16, %s7, [#allocation5]
    $region49: #{a_call__.1} parent=1 // pred_fallthru
      _
    // Predicated region
    $region50: #{a_call__.1} parent=1 // pred_check
      _
    $region51: #{a_call__.1} parent=1 // pred_check_branch
      %438 = sbr.rel (0) target = $region53
    $region52: #{a_call__.1} parent=1 // pred_region
      %439 = dma.done [#allocation5], 16
    $region53: #{a_call__.1} parent=1 // pred_fallthru
      _
    %440 = vsyncpa [#allocation4], 1
    %441 = vsyncpa [#allocation7], 1
    %442 = vsyncpa [#allocation10], 1
    %443 = vsyncpa [#allocation5], 1

</llo_original>
